<compile_context>
chip_gen: v6e
topology: v6e:2x2x1
jax: 0.10.0
libtpu: 0.0.40
codegen_flags: <defaults>
</compile_context>

<pallas_src>
import functools

import jax
import jax.numpy as jnp
from jax.experimental import pallas as pl
from jax.experimental.pallas import tpu as pltpu

EPS_PPO = 1e-5
CLIP_PARAM = 0.2
VALUE_LOSS_COEF = 0.5
ENTROPY_COEF = 0.01
NPAD = 128  # lane-dense padded head width (policy logits | value | zero pad)


def _vmem_spec():
    return pl.BlockSpec(memory_space=pltpu.MemorySpace.VMEM)


def _fast_recip(x):
    """Approx EUP reciprocal + one Newton-Raphson step (~f32 accurate)."""
    r = pl.reciprocal(x, approx=True)
    return r * (2.0 - x * r)


# -----------------------------------------------------------------------------
# get_advantages (standalone, API parity with PPO.get_advantages):
#   adv = returns[:-1] - value_preds[:-1], normalized with mean / unbiased std.
#   Lane-dense (1, T*N) layout; two-pass mean / variance.
# -----------------------------------------------------------------------------
def advantages_kernel(returns_ref, value_preds_ref, adv_ref):
    d = returns_ref[...] - value_preds_ref[...]
    n = jnp.float32(d.size)
    mean = jnp.sum(d) / n
    c = d - mean
    var = jnp.sum(c * c) / (n - 1.0)     # ddof = 1 (torch .std())
    adv_ref[...] = c / (jnp.sqrt(var) + EPS_PPO)


def get_advantages(returns, value_preds):
    r = returns[:-1]
    T, N = r.shape
    r_flat = r.reshape(1, T * N)                      # lane-dense
    v_flat = value_preds[:-1].reshape(1, T * N)
    adv = pl.pallas_call(
        advantages_kernel,
        out_shape=jax.ShapeDtypeStruct((1, T * N), jnp.float32),
        in_specs=[_vmem_spec(), _vmem_spec()],
        out_specs=_vmem_spec(),
    )(r_flat, v_flat)
    return adv.reshape(T, N)


# -----------------------------------------------------------------------------
# Fused PPO update kernel: advantages + evaluate_actions (linear policy +
# linear value head, categorical distribution) + clipped-surrogate /
# clipped-value / entropy losses, all in one pallas_call.
# -----------------------------------------------------------------------------
def ppo_update_kernel(obs_ref, w_ref, b_ref, rows_ref, adv_ref, loss_ref,
                      *, num_actions):
    # obs_ref:  (M, D)     observations
    # w_ref:    (D, NPAD)  [policy cols 0..A-1 | value col A | zeros]
    # b_ref:    (1, NPAD)  matching packed bias row
    # rows_ref: (M, 4)     [return, value_pred, old_action_log_prob, action_idx]
    # adv_ref:  (M, 1)     normalized advantages (output)
    # loss_ref: (1, 4)     [value_loss, action_loss, dist_entropy, total] (output)
    obs = obs_ref[...]

    # One lane-dense MXU matmul covers policy logits and the value head.
    out = jnp.dot(obs, w_ref[...],
                  preferred_element_type=jnp.float32) + b_ref[...]   # (M, NPAD)

    lane = jax.lax.broadcasted_iota(jnp.int32, out.shape, 1)
    act_mask = lane < num_actions

    # Masked, numerically stable softmax statistics over the A valid columns.
    neg_big = jnp.float32(-1e30)
    logits = jnp.where(act_mask, out, neg_big)
    m = jnp.max(logits, axis=-1, keepdims=True)
    z = logits - m
    ez = jnp.exp(z)                       # masked lanes underflow to exactly 0
    se = jnp.sum(ez, axis=-1, keepdims=True)                         # (M, 1)
    lse = jnp.log(se)
    inv_se = _fast_recip(se)

    # log-prob of the taken action: z[taken] - lse (no (M,128) logp temporary).
    act_idx = rows_ref[:, 3:4].astype(jnp.int32)                     # (M, 1)
    z_taken = jnp.sum(jnp.where(lane == act_idx, z, 0.0),
                      axis=-1, keepdims=True)
    alp = z_taken - lse

    # entropy = lse - (1/se) * sum(ez * z); masked lanes contribute 0.
    sez = jnp.sum(ez * z, axis=-1, keepdims=True)
    ent = lse - inv_se * sez                                         # (M, 1)

    values = out[:, num_actions:num_actions + 1]                     # (M, 1)

    ret = rows_ref[:, 0:1]
    vpred = rows_ref[:, 1:2]
    old_alp = rows_ref[:, 2:3]

    # --- normalized advantages: two-pass mean / unbiased std -----------------
    d = ret - vpred
    n = jnp.float32(d.shape[0])
    mean = jnp.sum(d) / n
    c = d - mean
    var = jnp.sum(c * c) / (n - 1.0)       # ddof = 1 (torch .std())
    adv = c / (jnp.sqrt(var) + EPS_PPO)
    adv_ref[...] = adv

    # --- clipped surrogate action loss ---------------------------------------
    ratio = jnp.exp(alp - old_alp)
    surr1 = ratio * adv
    surr2 = jnp.clip(ratio, 1.0 - CLIP_PARAM, 1.0 + CLIP_PARAM) * adv
    action_loss = -jnp.mean(jnp.minimum(surr1, surr2))

    # --- clipped value loss ---------------------------------------------------
    value_pred_clipped = vpred + jnp.clip(values - vpred, -CLIP_PARAM, CLIP_PARAM)
    value_losses = (values - ret) ** 2
    value_losses_clipped = (value_pred_clipped - ret) ** 2
    value_loss = 0.5 * jnp.mean(jnp.maximum(value_losses, value_losses_clipped))

    dist_entropy = jnp.mean(ent)
    total = value_loss * VALUE_LOSS_COEF + action_loss - dist_entropy * ENTROPY_COEF

    # Pack the four scalars into one (1, 4) vector store (single writeback DMA).
    k = jax.lax.broadcasted_iota(jnp.int32, (1, 4), 1)
    loss_ref[...] = jnp.where(k == 0, value_loss,
                     jnp.where(k == 1, action_loss,
                      jnp.where(k == 2, dist_entropy, total)))


def ppo_update(obs, w_full, b_full, rows, *, num_actions):
    M = obs.shape[0]
    adv, losses = pl.pallas_call(
        functools.partial(ppo_update_kernel, num_actions=num_actions),
        out_shape=(jax.ShapeDtypeStruct((M, 1), jnp.float32),
                   jax.ShapeDtypeStruct((1, 4), jnp.float32)),
        in_specs=[_vmem_spec()] * 4,
        out_specs=(_vmem_spec(), _vmem_spec()),
    )(obs, w_full, b_full, rows)
    return adv, losses


# -----------------------------------------------------------------------------
# Pure-JAX reference for correctness checking
# -----------------------------------------------------------------------------
def _reference(obs, act_oh, w_pi, b_pi, w_v, b_v, returns, value_preds, old_alp):
    adv = returns[:-1] - value_preds[:-1]
    adv_n = (adv - adv.mean()) / (adv.std(ddof=1) + EPS_PPO)
    M = obs.shape[0]
    logits = obs @ w_pi + b_pi
    logp = jax.nn.log_softmax(logits, axis=-1)
    alp = jnp.sum(logp * act_oh, axis=-1, keepdims=True)
    ent = -jnp.sum(jnp.exp(logp) * logp, axis=-1, keepdims=True)
    values = obs @ w_v + b_v
    adv_t = adv_n.reshape(M, 1)
    vpred = value_preds[:-1].reshape(M, 1)
    ret = returns[:-1].reshape(M, 1)
    ratio = jnp.exp(alp - old_alp)
    action_loss = -jnp.mean(jnp.minimum(
        ratio * adv_t, jnp.clip(ratio, 1 - CLIP_PARAM, 1 + CLIP_PARAM) * adv_t))
    vpc = vpred + jnp.clip(values - vpred, -CLIP_PARAM, CLIP_PARAM)
    value_loss = 0.5 * jnp.mean(jnp.maximum((values - ret) ** 2, (vpc - ret) ** 2))
    dist_entropy = jnp.mean(ent)
    total = value_loss * VALUE_LOSS_COEF + action_loss - dist_entropy * ENTROPY_COEF
    return adv_n, value_loss, action_loss, dist_entropy, total


if __name__ == "__main__":
    key = jax.random.PRNGKey(0)
    T, N, D, A = 8, 4, 32, 8     # time steps, envs, obs features, actions
    M = T * N                    # minibatch rows (num_mini_batch = 1)
    ks = jax.random.split(key, 8)

    obs = jax.random.normal(ks[0], (M, D), jnp.float32)
    actions = jax.random.randint(ks[1], (M,), 0, A)
    act_oh = jax.nn.one_hot(actions, A, dtype=jnp.float32)   # reference only

    # deterministic synthetic actor-critic parameters (linear policy & value heads)
    w_pi = 0.1 * jax.random.normal(ks[2], (D, A), jnp.float32)
    b_pi = jnp.zeros((1, A), jnp.float32)
    w_v = 0.1 * jax.random.normal(ks[3], (D, 1), jnp.float32)
    b_v = jnp.zeros((1, 1), jnp.float32)

    returns = jax.random.normal(ks[4], (T + 1, N), jnp.float32)
    value_preds = jax.random.normal(ks[5], (T + 1, N), jnp.float32)
    old_action_log_probs = -jnp.abs(jax.random.normal(ks[6], (M, 1), jnp.float32))

    # --- pack actor-critic heads into one lane-dense (D, 128) weight + bias ---
    w_full = (jnp.zeros((D, NPAD), jnp.float32)
              .at[:, :A].set(w_pi)
              .at[:, A:A + 1].set(w_v))
    b_full = (jnp.zeros((1, NPAD), jnp.float32)
              .at[:, :A].set(b_pi)
              .at[:, A:A + 1].set(b_v))

    # --- pack per-row scalars (incl. taken action index) into one (M, 4) ------
    rows = jnp.concatenate(
        [returns[:-1].reshape(M, 1),
         value_preds[:-1].reshape(M, 1),
         old_action_log_probs,
         actions.astype(jnp.float32).reshape(M, 1)], axis=1)

    # --- Pallas: single fused update (advantages come out of the same call) ---
    adv_fused, losses = ppo_update(obs, w_full, b_full, rows, num_actions=A)
    # standalone get_advantages kept only for API parity with PPO.get_advantages
    adv_api = get_advantages(returns, value_preds)                    # (T, N)

    jax.block_until_ready((adv_fused, adv_api, losses))

    value_loss = losses[0, 0]
    action_loss = losses[0, 1]
    dist_entropy = losses[0, 2]
    total_loss = losses[0, 3]

    # correctness check against pure-JAX reference
    adv_r, vl_r, al_r, de_r, tl_r = _reference(
        obs, act_oh, w_pi, b_pi, w_v, b_v,
        returns, value_preds, old_action_log_probs)
    assert jnp.allclose(adv_api, adv_r, atol=1e-5, rtol=1e-5)
    assert jnp.allclose(adv_fused, adv_r.reshape(M, 1), atol=1e-5, rtol=1e-5)
    assert jnp.allclose(value_loss, vl_r, atol=1e-5, rtol=1e-5)
    assert jnp.allclose(action_loss, al_r, atol=1e-5, rtol=1e-5)
    assert jnp.allclose(dist_entropy, de_r, atol=1e-5, rtol=1e-5)
    assert jnp.allclose(total_loss, tl_r, atol=1e-5, rtol=1e-5)

    print("KERNEL_OK")
</pallas_src>

<mosaic_0001>
module attributes {stable_mosaic.version = 11 : i64} {
  func.func @ppo_update_kernel(%arg0: memref<32x32xf32, #tpu.memory_space<vmem>>, %arg1: memref<32x128xf32, #tpu.memory_space<vmem>>, %arg2: memref<1x128xf32, #tpu.memory_space<vmem>>, %arg3: memref<32x4xf32, #tpu.memory_space<vmem>>, %arg4: memref<32x1xf32, #tpu.memory_space<vmem>>, %arg5: memref<1x4xf32, #tpu.memory_space<vmem>>) attributes {dimension_semantics = [], scalar_prefetch = 0 : i64, scratch_operands = 0 : i64, tpu.core_type = #tpu.core_type<tc>} {
    %c0 = arith.constant 0 : index
    %c0_0 = arith.constant 0 : index
    %0 = vector.load %arg0[%c0, %c0_0] : memref<32x32xf32, #tpu.memory_space<vmem>>, vector<32x32xf32>
    %c0_1 = arith.constant 0 : index
    %c0_2 = arith.constant 0 : index
    %1 = vector.load %arg1[%c0_1, %c0_2] : memref<32x128xf32, #tpu.memory_space<vmem>>, vector<32x128xf32>
    %cst = arith.constant dense<0.000000e+00> : vector<32x128xf32>
    %2 = tpu.matmul %0, %1, %cst {dimension_numbers = #tpu.dot_dimension_numbers<[1], [0], [0], [1], [0, 0, 1, 1], [], []>} : vector<32x32xf32>, vector<32x128xf32>, vector<32x128xf32> -> vector<32x128xf32>
    %c0_3 = arith.constant 0 : index
    %c0_4 = arith.constant 0 : index
    %3 = vector.load %arg2[%c0_3, %c0_4] : memref<1x128xf32, #tpu.memory_space<vmem>>, vector<1x128xf32>
    %4 = vector.broadcast %3 : vector<1x128xf32> to vector<32x128xf32>
    %5 = arith.addf %2, %4 : vector<32x128xf32>
    %6 = tpu.iota {dimensions = array<i32: 1>} : vector<32x128xi32>
    %c8_i32 = arith.constant 8 : i32
    %7 = vector.broadcast %c8_i32 : i32 to vector<32x128xi32>
    %8 = arith.cmpi slt, %6, %7 : vector<32x128xi32>
    %cst_5 = arith.constant -1.000000e+30 : f32
    %9 = vector.broadcast %cst_5 : f32 to vector<32x128xf32>
    %10 = arith.select %8, %5, %9 : vector<32x128xi1>, vector<32x128xf32>
    %cst_6 = arith.constant dense<0xFF800000> : vector<32xf32>
    %11 = vector.multi_reduction <maximumf>, %10, %cst_6 [1] : vector<32x128xf32> to vector<32xf32>
    %12 = vector.shape_cast %11 : vector<32xf32> to vector<32x1xf32>
    %13 = vector.broadcast %12 : vector<32x1xf32> to vector<32x128xf32>
    %14 = arith.subf %10, %13 : vector<32x128xf32>
    %15 = math.exp %14 : vector<32x128xf32>
    %cst_7 = arith.constant dense<0.000000e+00> : vector<32xf32>
    %16 = vector.multi_reduction <add>, %15, %cst_7 [1] : vector<32x128xf32> to vector<32xf32>
    %17 = vector.shape_cast %16 : vector<32xf32> to vector<32x1xf32>
    %18 = math.log %17 : vector<32x1xf32>
    %19 = tpu.reciprocal %17 {approx = true} : vector<32x1xf32> -> vector<32x1xf32>
    %20 = arith.mulf %17, %19 : vector<32x1xf32>
    %cst_8 = arith.constant 2.000000e+00 : f32
    %21 = vector.broadcast %cst_8 : f32 to vector<32x1xf32>
    %22 = arith.subf %21, %20 : vector<32x1xf32>
    %23 = arith.mulf %19, %22 : vector<32x1xf32>
    %c0_9 = arith.constant 0 : index
    %c3 = arith.constant 3 : index
    %24 = vector.load %arg3[%c0_9, %c3] : memref<32x4xf32, #tpu.memory_space<vmem>>, vector<32x1xf32>
    %25 = arith.fptosi %24 : vector<32x1xf32> to vector<32x1xi32>
    %26 = vector.broadcast %25 : vector<32x1xi32> to vector<32x128xi32>
    %27 = arith.cmpi eq, %6, %26 : vector<32x128xi32>
    %cst_10 = arith.constant 0.000000e+00 : f32
    %28 = vector.broadcast %cst_10 : f32 to vector<32x128xf32>
    %29 = arith.select %27, %14, %28 : vector<32x128xi1>, vector<32x128xf32>
    %cst_11 = arith.constant dense<0.000000e+00> : vector<32xf32>
    %30 = vector.multi_reduction <add>, %29, %cst_11 [1] : vector<32x128xf32> to vector<32xf32>
    %31 = vector.shape_cast %30 : vector<32xf32> to vector<32x1xf32>
    %32 = arith.subf %31, %18 : vector<32x1xf32>
    %33 = arith.mulf %15, %14 : vector<32x128xf32>
    %cst_12 = arith.constant dense<0.000000e+00> : vector<32xf32>
    %34 = vector.multi_reduction <add>, %33, %cst_12 [1] : vector<32x128xf32> to vector<32xf32>
    %35 = vector.shape_cast %34 : vector<32xf32> to vector<32x1xf32>
    %36 = arith.mulf %23, %35 : vector<32x1xf32>
    %37 = arith.subf %18, %36 : vector<32x1xf32>
    %38 = vector.extract_strided_slice %5 {offsets = [0, 8], sizes = [32, 1], strides = [1, 1]} : vector<32x128xf32> to vector<32x1xf32>
    %c0_13 = arith.constant 0 : index
    %c0_14 = arith.constant 0 : index
    %39 = vector.load %arg3[%c0_13, %c0_14] : memref<32x4xf32, #tpu.memory_space<vmem>>, vector<32x1xf32>
    %c0_15 = arith.constant 0 : index
    %c1 = arith.constant 1 : index
    %40 = vector.load %arg3[%c0_15, %c1] : memref<32x4xf32, #tpu.memory_space<vmem>>, vector<32x1xf32>
    %c0_16 = arith.constant 0 : index
    %c2 = arith.constant 2 : index
    %41 = vector.load %arg3[%c0_16, %c2] : memref<32x4xf32, #tpu.memory_space<vmem>>, vector<32x1xf32>
    %42 = arith.subf %39, %40 : vector<32x1xf32>
    %43 = vector.shape_cast %42 : vector<32x1xf32> to vector<1x32x1xf32>
    %cst_17 = arith.constant dense<0.000000e+00> : vector<1xf32>
    %44 = vector.multi_reduction <add>, %43, %cst_17 [1, 2] : vector<1x32x1xf32> to vector<1xf32>
    %45 = vector.shape_cast %44 : vector<1xf32> to vector<1x1x1xf32>
    %46 = vector.extract %45[0, 0, 0] : f32 from vector<1x1x1xf32>
    %cst_18 = arith.constant 3.200000e+01 : f32
    %47 = arith.divf %46, %cst_18 : f32
    %48 = vector.broadcast %47 : f32 to vector<32x1xf32>
    %49 = arith.subf %42, %48 : vector<32x1xf32>
    %50 = arith.mulf %49, %49 : vector<32x1xf32>
    %51 = vector.shape_cast %50 : vector<32x1xf32> to vector<1x32x1xf32>
    %cst_19 = arith.constant dense<0.000000e+00> : vector<1xf32>
    %52 = vector.multi_reduction <add>, %51, %cst_19 [1, 2] : vector<1x32x1xf32> to vector<1xf32>
    %53 = vector.shape_cast %52 : vector<1xf32> to vector<1x1x1xf32>
    %54 = vector.extract %53[0, 0, 0] : f32 from vector<1x1x1xf32>
    %cst_20 = arith.constant 3.200000e+01 : f32
    %cst_21 = arith.constant 1.000000e+00 : f32
    %55 = arith.subf %cst_20, %cst_21 : f32
    %56 = arith.divf %54, %55 : f32
    %57 = math.sqrt %56 : f32
    %cst_22 = arith.constant 9.99999974E-6 : f32
    %58 = arith.addf %57, %cst_22 : f32
    %59 = vector.broadcast %58 : f32 to vector<32x1xf32>
    %60 = arith.divf %49, %59 : vector<32x1xf32>
    %c0_23 = arith.constant 0 : index
    %c0_24 = arith.constant 0 : index
    %61 = vector.load %arg4[%c0_23, %c0_24] : memref<32x1xf32, #tpu.memory_space<vmem>>, vector<32x1xf32>
    tpu.vector_store %arg4[%c0_23, %c0_24], %60 {strides = array<i32>} : memref<32x1xf32, #tpu.memory_space<vmem>>, vector<32x1xf32>,
    %62 = arith.subf %32, %41 : vector<32x1xf32>
    %63 = math.exp %62 : vector<32x1xf32>
    %64 = arith.mulf %63, %60 : vector<32x1xf32>
    %cst_25 = arith.constant 8.000000e-01 : f32
    %cst_26 = arith.constant 1.200000e+00 : f32
    %65 = vector.broadcast %cst_25 : f32 to vector<32x1xf32>
    %66 = arith.maximumf %65, %63 : vector<32x1xf32>
    %67 = vector.broadcast %cst_26 : f32 to vector<32x1xf32>
    %68 = arith.minimumf %67, %66 : vector<32x1xf32>
    %69 = arith.mulf %68, %60 : vector<32x1xf32>
    %70 = arith.minimumf %64, %69 : vector<32x1xf32>
    %71 = vector.shape_cast %70 : vector<32x1xf32> to vector<1x32x1xf32>
    %cst_27 = arith.constant dense<0.000000e+00> : vector<1xf32>
    %72 = vector.multi_reduction <add>, %71, %cst_27 [1, 2] : vector<1x32x1xf32> to vector<1xf32>
    %73 = vector.shape_cast %72 : vector<1xf32> to vector<1x1x1xf32>
    %74 = vector.extract %73[0, 0, 0] : f32 from vector<1x1x1xf32>
    %cst_28 = arith.constant 3.200000e+01 : f32
    %75 = arith.divf %74, %cst_28 : f32
    %cst_29 = arith.constant 0.000000e+00 : f32
    %76 = arith.subf %cst_29, %75 : f32
    %77 = arith.subf %38, %40 : vector<32x1xf32>
    %cst_30 = arith.constant -2.000000e-01 : f32
    %cst_31 = arith.constant 2.000000e-01 : f32
    %78 = vector.broadcast %cst_30 : f32 to vector<32x1xf32>
    %79 = arith.maximumf %78, %77 : vector<32x1xf32>
    %80 = vector.broadcast %cst_31 : f32 to vector<32x1xf32>
    %81 = arith.minimumf %80, %79 : vector<32x1xf32>
    %82 = arith.addf %40, %81 : vector<32x1xf32>
    %83 = arith.subf %38, %39 : vector<32x1xf32>
    %84 = arith.mulf %83, %83 : vector<32x1xf32>
    %85 = arith.subf %82, %39 : vector<32x1xf32>
    %86 = arith.mulf %85, %85 : vector<32x1xf32>
    %87 = arith.maximumf %84, %86 : vector<32x1xf32>
    %88 = vector.shape_cast %87 : vector<32x1xf32> to vector<1x32x1xf32>
    %cst_32 = arith.constant dense<0.000000e+00> : vector<1xf32>
    %89 = vector.multi_reduction <add>, %88, %cst_32 [1, 2] : vector<1x32x1xf32> to vector<1xf32>
    %90 = vector.shape_cast %89 : vector<1xf32> to vector<1x1x1xf32>
    %91 = vector.extract %90[0, 0, 0] : f32 from vector<1x1x1xf32>
    %cst_33 = arith.constant 3.200000e+01 : f32
    %92 = arith.divf %91, %cst_33 : f32
    %cst_34 = arith.constant 5.000000e-01 : f32
    %93 = arith.mulf %cst_34, %92 : f32
    %94 = vector.shape_cast %37 : vector<32x1xf32> to vector<1x32x1xf32>
    %cst_35 = arith.constant dense<0.000000e+00> : vector<1xf32>
    %95 = vector.multi_reduction <add>, %94, %cst_35 [1, 2] : vector<1x32x1xf32> to vector<1xf32>
    %96 = vector.shape_cast %95 : vector<1xf32> to vector<1x1x1xf32>
    %97 = vector.extract %96[0, 0, 0] : f32 from vector<1x1x1xf32>
    %cst_36 = arith.constant 3.200000e+01 : f32
    %98 = arith.divf %97, %cst_36 : f32
    %cst_37 = arith.constant 5.000000e-01 : f32
    %99 = arith.mulf %93, %cst_37 : f32
    %100 = arith.addf %99, %76 : f32
    %cst_38 = arith.constant 0.00999999977 : f32
    %101 = arith.mulf %98, %cst_38 : f32
    %102 = arith.subf %100, %101 : f32
    %103 = tpu.iota {dimensions = array<i32: 1>} : vector<1x4xi32>
    %c0_i32 = arith.constant 0 : i32
    %104 = vector.broadcast %c0_i32 : i32 to vector<1x4xi32>
    %105 = arith.cmpi eq, %103, %104 : vector<1x4xi32>
    %c1_i32 = arith.constant 1 : i32
    %106 = vector.broadcast %c1_i32 : i32 to vector<1x4xi32>
    %107 = arith.cmpi eq, %103, %106 : vector<1x4xi32>
    %c2_i32 = arith.constant 2 : i32
    %108 = vector.broadcast %c2_i32 : i32 to vector<1x4xi32>
    %109 = arith.cmpi eq, %103, %108 : vector<1x4xi32>
    %110 = vector.broadcast %98 : f32 to vector<1x4xf32>
    %111 = vector.broadcast %102 : f32 to vector<1x4xf32>
    %112 = arith.select %109, %110, %111 : vector<1x4xi1>, vector<1x4xf32>
    %113 = vector.broadcast %76 : f32 to vector<1x4xf32>
    %114 = arith.select %107, %113, %112 : vector<1x4xi1>, vector<1x4xf32>
    %115 = vector.broadcast %93 : f32 to vector<1x4xf32>
    %116 = arith.select %105, %115, %114 : vector<1x4xi1>, vector<1x4xf32>
    %c0_39 = arith.constant 0 : index
    %c0_40 = arith.constant 0 : index
    %117 = vector.load %arg5[%c0_39, %c0_40] : memref<1x4xf32, #tpu.memory_space<vmem>>, vector<1x4xf32>
    tpu.vector_store %arg5[%c0_39, %c0_40], %116 {strides = array<i32>} : memref<1x4xf32, #tpu.memory_space<vmem>>, vector<1x4xf32>,
    return
  }
}

</mosaic_0001>

<llo_original>
// kernel: tpu_custom_call.1
$region0: #{tpu_custom_call.1}
  #allocation0 [shape = 'u32[]', space=smem, size = 0x4, offset = 0x4, fixed_abs, tag = 'smem constant byte address 0x4 - core index']
  #allocation1 [shape = 'u32[144,128]{1,0:T(1,128)}', space=vmem, size = 0x12000, scoped, tag = 'internal scratch']
  %s0 = inlined_call_operand.vmem [shape: f32[32,32], index: 0, kind: input, shape index: {}]
  %s1 = inlined_call_operand.hbm [shape: f32[32,128], index: 1, kind: input, shape index: {}]
  %s2 = inlined_call_operand.vmem [shape: f32[1,128], index: 2, kind: input, shape index: {}]
  %s3 = inlined_call_operand.vmem [shape: f32[32,4], index: 3, kind: input, shape index: {}]
  %s4 = inlined_call_operand.vmem [shape: f32[32,1], index: 4, kind: output, shape index: {0}]
  %s5 = inlined_call_operand.hbm [shape: f32[1,4], index: 5, kind: output, shape index: {1}]
  %6 = xla_tuple %s4, %s5
  %s7 = sld [smem:[#allocation0]]
  $region38: #{tpu_custom_call.1} parent=0
    _
  %s9 = ssub.s32 1, %s7
  %s10 = scalar_select 0, %s9, %s7
  $region1: #{tpu_custom_call.1} parent=0
    #allocation2 [shape = 'u8[16384]{0}', space=vmem, size = 0x4000, scoped, tag = 'input window, operand 1, single buffered']
    #allocation3 [shape = 's32[1]{0}', space=sflag, size = 0x4, scoped, tag = 'scoped memory for tpu_custom_call.1']
    #allocation4 [shape = 's32[1]{0}', space=sflag, size = 0x4, scoped, tag = 'scoped memory for tpu_custom_call.1']
    #allocation5 [shape = 'u8[512]{0}', space=vmem, size = 0x400, scoped, tag = 'output window, operand 1, single buffered']
    %11 = vsyncpa [#allocation3], 0
    %12 = vsyncpa [#allocation4], 0
    // Predicated region
    $region2: #{tpu_custom_call.1} parent=1 // pred_check
      _
    $region3: #{tpu_custom_call.1} parent=1 // pred_check_branch
      %14 = sbr.rel (0) target = $region5
    $region4: #{tpu_custom_call.1} parent=1 // pred_region
      _
    $region5: #{tpu_custom_call.1} parent=1 // pred_fallthru
      _
    // Predicated region
    $region6: #{tpu_custom_call.1} parent=1 // pred_check
      _
    $region7: #{tpu_custom_call.1} parent=1 // pred_check_branch
      %16 = sbr.rel (0) target = $region9
    $region8: #{tpu_custom_call.1} parent=1 // pred_region
      %s18 = ssub.s32 512, 512
      %19 = vsyncadd [#allocation3], %s18
      %s20 = sshll.u32 [#allocation2], 4
      %s21 = int_to_ptr.vmem [resolvable:$true] %s20
      %26 = dma.hbm_to_vmem [thread:$0]  %s1, 512, %s21, [#allocation3], 128, 128, 8
    $region9: #{tpu_custom_call.1} parent=1 // pred_fallthru
      _
    // Predicated region
    $region10: #{tpu_custom_call.1} parent=1 // pred_check
      _
    $region11: #{tpu_custom_call.1} parent=1 // pred_check_branch
      %28 = sbr.rel (0) target = $region13
    $region12: #{tpu_custom_call.1} parent=1 // pred_region
      _
    $region13: #{tpu_custom_call.1} parent=1 // pred_fallthru
      _
    // Predicated region
    $region14: #{tpu_custom_call.1} parent=1 // pred_check
      _
    $region15: #{tpu_custom_call.1} parent=1 // pred_check_branch
      %30 = sbr.rel (0) target = $region17
    $region16: #{tpu_custom_call.1} parent=1 // pred_region
      _
    $region17: #{tpu_custom_call.1} parent=1 // pred_fallthru
      _
    // Predicated region
    $region18: #{tpu_custom_call.1} parent=1 // pred_check
      _
    $region19: #{tpu_custom_call.1} parent=1 // pred_check_branch
      %32 = sbr.rel (0) target = $region21
    $region20: #{tpu_custom_call.1} parent=1 // pred_region
      %33 = dma.done [#allocation3], 512
    $region21: #{tpu_custom_call.1} parent=1 // pred_fallthru
      _
    %v34 = vld [vmem:[%s0] sm:$0xff]
    %v35 = vld [vmem:[%s0 + $0x8] sm:$0xff]
    %v36 = vld [vmem:[%s0 + $0x10] sm:$0xff]
    %v37 = vld [vmem:[%s0 + $0x18] sm:$0xff]
    %v38 = vld [vmem:[#allocation2] sm:$0xff]
    %v39 = vld [vmem:[#allocation2 + $0x8] sm:$0xff]
    %v40 = vld [vmem:[#allocation2 + $0x10] sm:$0xff]
    %v41 = vld [vmem:[#allocation2 + $0x18] sm:$0xff]
    %v42 = vld [vmem:[%s2] sm:$0x1]
    %v44 = vlaneseq
    %v45 = vshrl.u32 %v44, 7
    %v46 = vsub.s32 0, %v45
    %v47 = vrot.slane %v42, %v46
    %vm49 = vcmask 261120
    %v51 = vsel %vm49, %v34, 0
    %v54 = vsel %vm49, %v35, 0
    %v57 = vsel %vm49, %v36, 0
    %v60 = vsel %vm49, %v37, 0
    %62 = vmatprep.subr.mxu0 0.0
    %63 = vmatpush1.msra.mxu0 0.0
    %64 = vmatprep.subr.mxu0 0.0
    %65 = vmatpush1.msra.mxu0 0.0
    %66 = vmatprep.subr.mxu0 0.0
    %67 = vmatpush1.msra.mxu0 0.0
    %68 = vmatprep.subr.mxu0 0.0
    %69 = vmatpush1.msra.mxu0 0.0
    %70 = vmatprep.subr.mxu0 0.0
    %71 = vmatpush1.msra.mxu0 0.0
    %72 = vmatprep.subr.mxu0 0.0
    %73 = vmatpush1.msra.mxu0 0.0
    %74 = vmatprep.subr.mxu0 0.0
    %75 = vmatpush1.msra.mxu0 0.0
    %76 = vmatprep.subr.mxu0 0.0
    %77 = vmatpush1.msra.mxu0 0.0
    %78 = vmatprep.subr.mxu0 0.0
    %79 = vmatpush1.msra.mxu0 0.0
    %80 = vmatprep.subr.mxu0 0.0
    %81 = vmatpush1.msra.mxu0 0.0
    %82 = vmatprep.subr.mxu0 0.0
    %83 = vmatpush1.msra.mxu0 0.0
    %84 = vmatprep.subr.mxu0 0.0
    %85 = vmatpush1.msra.mxu0 0.0
    %86 = vmatprep.subr.mxu0 0.0
    %87 = vmatpush1.msra.mxu0 %v41
    %88 = vmatprep.subr.mxu0 0.0
    %89 = vmatpush1.msra.mxu0 %v40
    %90 = vmatprep.subr.mxu0 0.0
    %91 = vmatpush1.msra.mxu0 %v39
    %92 = vmatprep.subr.mxu0 0.0
    %93 = vmatpush1.msra.mxu0 %v38
    %94 = vmatprep.subr.mxu0 0.0
    %95 = vmatpush2.msra.mxu0 0.0
    %96 = vmatprep.subr.mxu0 0.0
    %97 = vmatpush2.msra.mxu0 0.0
    %98 = vmatprep.subr.mxu0 0.0
    %99 = vmatpush2.msra.mxu0 0.0
    %100 = vmatprep.subr.mxu0 0.0
    %101 = vmatpush2.msra.mxu0 0.0
    %102 = vmatprep.subr.mxu0 0.0
    %103 = vmatpush2.msra.mxu0 0.0
    %104 = vmatprep.subr.mxu0 0.0
    %105 = vmatpush2.msra.mxu0 0.0
    %106 = vmatprep.subr.mxu0 0.0
    %107 = vmatpush2.msra.mxu0 0.0
    %108 = vmatprep.subr.mxu0 0.0
    %109 = vmatpush2.msra.mxu0 0.0
    %110 = vmatprep.subr.mxu0 0.0
    %111 = vmatpush2.msra.mxu0 0.0
    %112 = vmatprep.subr.mxu0 0.0
    %113 = vmatpush2.msra.mxu0 0.0
    %114 = vmatprep.subr.mxu0 0.0
    %115 = vmatpush2.msra.mxu0 0.0
    %116 = vmatprep.subr.mxu0 0.0
    %117 = vmatpush2.msra.mxu0 0.0
    %118 = vmatprep.subr.mxu0 0.0
    %119 = vmatpush2.msra.mxu0 0.0
    %120 = vmatprep.subr.mxu0 0.0
    %121 = vmatpush2.msra.mxu0 0.0
    %122 = vmatprep.subr.mxu0 0.0
    %123 = vmatpush2.msra.mxu0 0.0
    %124 = vmatprep.subr.mxu0 0.0
    %125 = vmatpush2.msra.mxu0 0.0
    %126 = vmatprep.mubr.f32.mxu0 0.0
    %127 = vmatmul.mubr.f32.gmra.mxu0 %v51
    %v128 = vpop.f32.mrf.mxu0
    %v129 = vadd.f32 %v47, %v128
    %v130 = vpop.f32.mrf.mxu0
    %131 = vmatprep.mubr.f32.mxu0 0.0
    %132 = vmatmul.mubr.f32.gmra.mxu0 %v54
    %v133 = vpop.f32.mrf.mxu0
    %v134 = vadd.f32 %v47, %v133
    %v135 = vpop.f32.mrf.mxu0
    %136 = vmatprep.mubr.f32.mxu0 0.0
    %137 = vmatmul.mubr.f32.gmra.mxu0 %v57
    %v138 = vpop.f32.mrf.mxu0
    %v139 = vadd.f32 %v47, %v138
    %v140 = vpop.f32.mrf.mxu0
    %141 = vmatprep.mubr.f32.mxu0 0.0
    %142 = vmatmul.mubr.f32.gmra.mxu0 %v60
    %v143 = vpop.f32.mrf.mxu0
    %v144 = vadd.f32 %v47, %v143
    %v145 = vpop.f32.mrf.mxu0
    %146 = vdwg.mxu0
    %v147 = vlaneseq
    %v148 = vand.u32 %v147, 127
    %vm149 = vcmp.lt.s32.totalorder %v148, 8
    %v150 = vsel %vm149, %v129, -1e+30
    %v151 = vsel %vm149, %v134, -1e+30
    %v152 = vsel %vm149, %v139, -1e+30
    %v153 = vsel %vm149, %v144, -1e+30
    %154 = vmax.xlane.f32.xlu0 %v150
    %v155 = vpop.xlane.xlu0 %154
    %156 = vmax.xlane.f32.xlu0 %v151
    %v157 = vpop.xlane.xlu0 %156
    %158 = vmax.xlane.f32.xlu0 %v152
    %v159 = vpop.xlane.xlu0 %158
    %160 = vmax.xlane.f32.xlu0 %v153
    %v161 = vpop.xlane.xlu0 %160
    %v162 = vsub.f32 %v150, %v155
    %v163 = vsub.f32 %v151, %v157
    %v164 = vsub.f32 %v152, %v159
    %v165 = vsub.f32 %v153, %v161
    %v166 = vmul.f32 %v162, 1.442695
    %v167 = vpow.pop %v166
    %v168 = vmul.f32 %v163, 1.442695
    %v169 = vpow.pop %v168
    %v170 = vmul.f32 %v164, 1.442695
    %v171 = vpow.pop %v170
    %v172 = vmul.f32 %v165, 1.442695
    %v173 = vpow.pop %v172
    %174 = vadd.xlane.f32.xlu0 %v167
    %v175 = vpop.xlane.xlu0 %174
    %176 = vadd.xlane.f32.xlu0 %v169
    %v177 = vpop.xlane.xlu0 %176
    %178 = vadd.xlane.f32.xlu0 %v171
    %v179 = vpop.xlane.xlu0 %178
    %180 = vadd.xlane.f32.xlu0 %v173
    %v181 = vpop.xlane.xlu0 %180
    %v182 = vlog2.pop %v175
    %v183 = vmul.f32 %v182, 0.6931472
    %v184 = vlog2.pop %v177
    %v185 = vmul.f32 %v184, 0.6931472
    %v186 = vlog2.pop %v179
    %v187 = vmul.f32 %v186, 0.6931472
    %v188 = vlog2.pop %v181
    %v189 = vmul.f32 %v188, 0.6931472
    %v190 = vrcp.pop %v175
    %v191 = vrcp.pop %v177
    %v192 = vrcp.pop %v179
    %v193 = vrcp.pop %v181
    %v194 = vmul.f32 %v175, %v190
    %v195 = vmul.f32 %v177, %v191
    %v196 = vmul.f32 %v179, %v192
    %v197 = vmul.f32 %v181, %v193
    %v198 = vsub.f32 2.0, %v194
    %v199 = vsub.f32 2.0, %v195
    %v200 = vsub.f32 2.0, %v196
    %v201 = vsub.f32 2.0, %v197
    %v202 = vmul.f32 %v190, %v198
    %v203 = vmul.f32 %v191, %v199
    %v204 = vmul.f32 %v192, %v200
    %v205 = vmul.f32 %v193, %v201
    %v206 = vld [vmem:[%s3] sm:$0xff]
    %v207 = vld [vmem:[%s3 + $0x8] sm:$0xff]
    %v208 = vld [vmem:[%s3 + $0x10] sm:$0xff]
    %v209 = vld [vmem:[%s3 + $0x18] sm:$0xff]
    %v210 = vcvt.f32.s32.to.zero.pseudo %v206
    %v211 = vcvt.f32.s32.to.zero.pseudo %v207
    %v212 = vcvt.f32.s32.to.zero.pseudo %v208
    %v213 = vcvt.f32.s32.to.zero.pseudo %v209
    %214 = vset.pattern.permute.xlu0 3
    %215 = vperm.xlu0 %214, %v210
    %v216 = vpop.permute.xlu0 %215
    %217 = vset.pattern.permute.xlu0 3
    %218 = vperm.xlu0 %217, %v211
    %v219 = vpop.permute.xlu0 %218
    %220 = vset.pattern.permute.xlu0 3
    %221 = vperm.xlu0 %220, %v212
    %v222 = vpop.permute.xlu0 %221
    %223 = vset.pattern.permute.xlu0 3
    %224 = vperm.xlu0 %223, %v213
    %v225 = vpop.permute.xlu0 %224
    %vm226 = vcmp.eq.s32.totalorder %v148, %v216
    %vm227 = vcmp.eq.s32.totalorder %v148, %v219
    %vm228 = vcmp.eq.s32.totalorder %v148, %v222
    %vm229 = vcmp.eq.s32.totalorder %v148, %v225
    %v230 = vsel %vm226, %v162, 0.0
    %v231 = vsel %vm227, %v163, 0.0
    %v232 = vsel %vm228, %v164, 0.0
    %v233 = vsel %vm229, %v165, 0.0
    %234 = vadd.xlane.f32.xlu0 %v230
    %v235 = vpop.xlane.xlu0 %234
    %236 = vadd.xlane.f32.xlu0 %v231
    %v237 = vpop.xlane.xlu0 %236
    %238 = vadd.xlane.f32.xlu0 %v232
    %v239 = vpop.xlane.xlu0 %238
    %240 = vadd.xlane.f32.xlu0 %v233
    %v241 = vpop.xlane.xlu0 %240
    %v242 = vsub.f32 %v235, %v183
    %v243 = vsub.f32 %v237, %v185
    %v244 = vsub.f32 %v239, %v187
    %v245 = vsub.f32 %v241, %v189
    %v246 = vmul.f32 %v167, %v162
    %v247 = vmul.f32 %v169, %v163
    %v248 = vmul.f32 %v171, %v164
    %v249 = vmul.f32 %v173, %v165
    %250 = vadd.xlane.f32.xlu0 %v246
    %v251 = vpop.xlane.xlu0 %250
    %252 = vadd.xlane.f32.xlu0 %v247
    %v253 = vpop.xlane.xlu0 %252
    %254 = vadd.xlane.f32.xlu0 %v248
    %v255 = vpop.xlane.xlu0 %254
    %256 = vadd.xlane.f32.xlu0 %v249
    %v257 = vpop.xlane.xlu0 %256
    %v258 = vmul.f32 %v202, %v251
    %v259 = vmul.f32 %v203, %v253
    %v260 = vmul.f32 %v204, %v255
    %v261 = vmul.f32 %v205, %v257
    %v262 = vsub.f32 %v183, %v258
    %v263 = vsub.f32 %v185, %v259
    %v264 = vsub.f32 %v187, %v260
    %v265 = vsub.f32 %v189, %v261
    %270 = vrot.lane.b32.xlu0 %v206, 127
    %v271 = vpop.permute.xlu0 %270
    %272 = vrot.lane.b32.xlu0 %v207, 127
    %v273 = vpop.permute.xlu0 %272
    %274 = vrot.lane.b32.xlu0 %v208, 127
    %v275 = vpop.permute.xlu0 %274
    %276 = vrot.lane.b32.xlu0 %v209, 127
    %v277 = vpop.permute.xlu0 %276
    %v282 = vsub.f32 %v206, %v271
    %v283 = vsub.f32 %v207, %v273
    %v284 = vsub.f32 %v208, %v275
    %v285 = vsub.f32 %v209, %v277
    %vm286 = vcmask 7168
    %v287 = vsel %vm286, %v282, 0.0
    %v288 = vsel %vm286, %v283, 0.0
    %v289 = vadd.f32 %v287, %v288
    %v290 = vsel %vm286, %v284, 0.0
    %v291 = vadd.f32 %v289, %v290
    %v292 = vsel %vm286, %v285, 0.0
    %v293 = vadd.f32 %v291, %v292
    %294 = vadd.xlane.f32.xlu0 %v293
    %v295 = vpop.xlane.xlu0 %294
    %v296 = vrot.slane %v295, 4
    %v297 = vadd.f32 %v295, %v296
    %v298 = vrot.slane %v297, 2
    %v299 = vadd.f32 %v297, %v298
    %v300 = vrot.slane %v299, 1
    %v301 = vadd.f32 %v299, %v300
    %s302 = vtos %v301
    %v303 = vrcp.pop 32.0
    %s304 = vtos %v303
    %s305 = smul.f32 %s302, %s304
    %v306 = vstv %s305
    %v307 = vsub.f32 %v282, %v306
    %v308 = vsub.f32 %v283, %v306
    %v309 = vsub.f32 %v284, %v306
    %v310 = vsub.f32 %v285, %v306
    %v311 = vmul.f32 %v307, %v307
    %v312 = vmul.f32 %v308, %v308
    %v313 = vmul.f32 %v309, %v309
    %v314 = vmul.f32 %v310, %v310
    %v315 = vsel %vm286, %v311, 0.0
    %v316 = vsel %vm286, %v312, 0.0
    %v317 = vadd.f32 %v315, %v316
    %v318 = vsel %vm286, %v313, 0.0
    %v319 = vadd.f32 %v317, %v318
    %v320 = vsel %vm286, %v314, 0.0
    %v321 = vadd.f32 %v319, %v320
    %322 = vadd.xlane.f32.xlu0 %v321
    %v323 = vpop.xlane.xlu0 %322
    %v324 = vrot.slane %v323, 4
    %v325 = vadd.f32 %v323, %v324
    %v326 = vrot.slane %v325, 2
    %v327 = vadd.f32 %v325, %v326
    %v328 = vrot.slane %v327, 1
    %v329 = vadd.f32 %v327, %v328
    %s330 = vtos %v329
    %v331 = vrcp.pop 31.0
    %s332 = vtos %v331
    %s333 = smul.f32 %s330, %s332
    %v334 = vstv %s333
    %v335 = vrsqrt.pop %v334
    %v336 = vmul.f32 %v334, %v335
    %vm337 = vcmp.eq.f32.partialorder %v334, inf
    %v338 = vsel %vm337, %v334, %v336
    %vm339 = vcmp.eq.f32.partialorder %v334, 0.0
    %v340 = vand.u32 %v334, 2147483648
    %v341 = vsel %vm339, %v340, %v338
    %s342 = vtos %v341
    %s343 = sadd.f32 %s342, 1e-05
    %v344 = vstv %s343
    %v345 = vrcp.pop %v344
    %v346 = vmul.f32 %v307, %v345
    %v347 = vmul.f32 %v308, %v345
    %v348 = vmul.f32 %v309, %v345
    %v349 = vmul.f32 %v310, %v345
    %350 = vst.msk [vmem:[%s4] sm:$0xff] %vm286, %v346
    %351 = vst.msk [vmem:[%s4 + $0x8] sm:$0xff] %vm286, %v347
    %352 = vst.msk [vmem:[%s4 + $0x10] sm:$0xff] %vm286, %v348
    %353 = vst.msk [vmem:[%s4 + $0x18] sm:$0xff] %vm286, %v349
    %v354 = vsub.f32 %v242, %v206
    %v355 = vsub.f32 %v243, %v207
    %v356 = vsub.f32 %v244, %v208
    %v357 = vsub.f32 %v245, %v209
    %v358 = vmul.f32 %v354, 1.442695
    %v359 = vpow.pop %v358
    %v360 = vmul.f32 %v355, 1.442695
    %v361 = vpow.pop %v360
    %v362 = vmul.f32 %v356, 1.442695
    %v363 = vpow.pop %v362
    %v364 = vmul.f32 %v357, 1.442695
    %v365 = vpow.pop %v364
    %370 = vrot.lane.b32.xlu0 %v346, 2
    %v371 = vpop.permute.xlu0 %370
    %372 = vrot.lane.b32.xlu0 %v347, 2
    %v373 = vpop.permute.xlu0 %372
    %374 = vrot.lane.b32.xlu0 %v348, 2
    %v375 = vpop.permute.xlu0 %374
    %376 = vrot.lane.b32.xlu0 %v349, 2
    %v377 = vpop.permute.xlu0 %376
    %v382 = vmul.f32 %v359, %v371
    %v383 = vmul.f32 %v361, %v373
    %v384 = vmul.f32 %v363, %v375
    %v385 = vmul.f32 %v365, %v377
    %v386 = vmax.f32 %v359, 0.8
    %v387 = vmax.f32 %v361, 0.8
    %v388 = vmax.f32 %v363, 0.8
    %v389 = vmax.f32 %v365, 0.8
    %v390 = vmin.f32 %v386, 1.2
    %v391 = vmin.f32 %v387, 1.2
    %v392 = vmin.f32 %v388, 1.2
    %v393 = vmin.f32 %v389, 1.2
    %v394 = vmul.f32 %v390, %v371
    %v395 = vmul.f32 %v391, %v373
    %v396 = vmul.f32 %v392, %v375
    %v397 = vmul.f32 %v393, %v377
    %v398 = vmin.f32 %v382, %v394
    %v399 = vmin.f32 %v383, %v395
    %v400 = vmin.f32 %v384, %v396
    %v401 = vmin.f32 %v385, %v397
    %406 = vrot.lane.b32.xlu0 %v398, 126
    %v407 = vpop.permute.xlu0 %406
    %408 = vrot.lane.b32.xlu0 %v399, 126
    %v409 = vpop.permute.xlu0 %408
    %410 = vrot.lane.b32.xlu0 %v400, 126
    %v411 = vpop.permute.xlu0 %410
    %412 = vrot.lane.b32.xlu0 %v401, 126
    %v413 = vpop.permute.xlu0 %412
    %v418 = vsel %vm286, %v407, 0.0
    %v419 = vsel %vm286, %v409, 0.0
    %v420 = vadd.f32 %v418, %v419
    %v421 = vsel %vm286, %v411, 0.0
    %v422 = vadd.f32 %v420, %v421
    %v423 = vsel %vm286, %v413, 0.0
    %v424 = vadd.f32 %v422, %v423
    %425 = vadd.xlane.f32.xlu0 %v424
    %v426 = vpop.xlane.xlu0 %425
    %v427 = vrot.slane %v426, 4
    %v428 = vadd.f32 %v426, %v427
    %v429 = vrot.slane %v428, 2
    %v430 = vadd.f32 %v428, %v429
    %v431 = vrot.slane %v430, 1
    %v432 = vadd.f32 %v430, %v431
    %s433 = vtos %v432
    %v434 = vrcp.pop 32.0
    %s435 = vtos %v434
    %s436 = smul.f32 %s433, %s435
    %s437 = ssub.f32 0.0, %s436
    %438 = vrot.lane.b32.xlu0 %v206, 7
    %v439 = vpop.permute.xlu0 %438
    %440 = vrot.lane.b32.xlu0 %v207, 7
    %v441 = vpop.permute.xlu0 %440
    %442 = vrot.lane.b32.xlu0 %v208, 7
    %v443 = vpop.permute.xlu0 %442
    %444 = vrot.lane.b32.xlu0 %v209, 7
    %v445 = vpop.permute.xlu0 %444
    %v450 = vsub.f32 %v129, %v439
    %v451 = vsub.f32 %v134, %v441
    %v452 = vsub.f32 %v139, %v443
    %v453 = vsub.f32 %v144, %v445
    %v454 = vmax.f32 %v450, -0.2
    %v455 = vmax.f32 %v451, -0.2
    %v456 = vmax.f32 %v452, -0.2
    %v457 = vmax.f32 %v453, -0.2
    %v458 = vmin.f32 %v454, 0.2
    %v459 = vmin.f32 %v455, 0.2
    %v460 = vmin.f32 %v456, 0.2
    %v461 = vmin.f32 %v457, 0.2
    %466 = vrot.lane.b32.xlu0 %v458, 121
    %v467 = vpop.permute.xlu0 %466
    %468 = vrot.lane.b32.xlu0 %v459, 121
    %v469 = vpop.permute.xlu0 %468
    %470 = vrot.lane.b32.xlu0 %v460, 121
    %v471 = vpop.permute.xlu0 %470
    %472 = vrot.lane.b32.xlu0 %v461, 121
    %v473 = vpop.permute.xlu0 %472
    %v478 = vadd.f32 %v206, %v467
    %v479 = vadd.f32 %v207, %v469
    %v480 = vadd.f32 %v208, %v471
    %v481 = vadd.f32 %v209, %v473
    %482 = vrot.lane.b32.xlu0 %v206, 8
    %v483 = vpop.permute.xlu0 %482
    %484 = vrot.lane.b32.xlu0 %v207, 8
    %v485 = vpop.permute.xlu0 %484
    %486 = vrot.lane.b32.xlu0 %v208, 8
    %v487 = vpop.permute.xlu0 %486
    %488 = vrot.lane.b32.xlu0 %v209, 8
    %v489 = vpop.permute.xlu0 %488
    %v494 = vsub.f32 %v129, %v483
    %v495 = vsub.f32 %v134, %v485
    %v496 = vsub.f32 %v139, %v487
    %v497 = vsub.f32 %v144, %v489
    %v498 = vmul.f32 %v494, %v494
    %v499 = vmul.f32 %v495, %v495
    %v500 = vmul.f32 %v496, %v496
    %v501 = vmul.f32 %v497, %v497
    %502 = vrot.lane.b32.xlu0 %v206, 1
    %v503 = vpop.permute.xlu0 %502
    %504 = vrot.lane.b32.xlu0 %v207, 1
    %v505 = vpop.permute.xlu0 %504
    %506 = vrot.lane.b32.xlu0 %v208, 1
    %v507 = vpop.permute.xlu0 %506
    %508 = vrot.lane.b32.xlu0 %v209, 1
    %v509 = vpop.permute.xlu0 %508
    %v514 = vsub.f32 %v478, %v503
    %v515 = vsub.f32 %v479, %v505
    %v516 = vsub.f32 %v480, %v507
    %v517 = vsub.f32 %v481, %v509
    %v518 = vmul.f32 %v514, %v514
    %v519 = vmul.f32 %v515, %v515
    %v520 = vmul.f32 %v516, %v516
    %v521 = vmul.f32 %v517, %v517
    %526 = vrot.lane.b32.xlu0 %v518, 7
    %v527 = vpop.permute.xlu0 %526
    %528 = vrot.lane.b32.xlu0 %v519, 7
    %v529 = vpop.permute.xlu0 %528
    %530 = vrot.lane.b32.xlu0 %v520, 7
    %v531 = vpop.permute.xlu0 %530
    %532 = vrot.lane.b32.xlu0 %v521, 7
    %v533 = vpop.permute.xlu0 %532
    %v538 = vmax.f32 %v498, %v527
    %v539 = vmax.f32 %v499, %v529
    %v540 = vmax.f32 %v500, %v531
    %v541 = vmax.f32 %v501, %v533
    %546 = vrot.lane.b32.xlu0 %v538, 120
    %v547 = vpop.permute.xlu0 %546
    %548 = vrot.lane.b32.xlu0 %v539, 120
    %v549 = vpop.permute.xlu0 %548
    %550 = vrot.lane.b32.xlu0 %v540, 120
    %v551 = vpop.permute.xlu0 %550
    %552 = vrot.lane.b32.xlu0 %v541, 120
    %v553 = vpop.permute.xlu0 %552
    %v558 = vsel %vm286, %v547, 0.0
    %v559 = vsel %vm286, %v549, 0.0
    %v560 = vadd.f32 %v558, %v559
    %v561 = vsel %vm286, %v551, 0.0
    %v562 = vadd.f32 %v560, %v561
    %v563 = vsel %vm286, %v553, 0.0
    %v564 = vadd.f32 %v562, %v563
    %565 = vadd.xlane.f32.xlu0 %v564
    %v566 = vpop.xlane.xlu0 %565
    %v567 = vrot.slane %v566, 4
    %v568 = vadd.f32 %v566, %v567
    %v569 = vrot.slane %v568, 2
    %v570 = vadd.f32 %v568, %v569
    %v571 = vrot.slane %v570, 1
    %v572 = vadd.f32 %v570, %v571
    %s573 = vtos %v572
    %v574 = vrcp.pop 32.0
    %s575 = vtos %v574
    %s576 = smul.f32 %s573, %s575
    %s577 = smul.f32 %s576, 0.5
    %v578 = vsel %vm286, %v262, 0.0
    %v579 = vsel %vm286, %v263, 0.0
    %v580 = vadd.f32 %v578, %v579
    %v581 = vsel %vm286, %v264, 0.0
    %v582 = vadd.f32 %v580, %v581
    %v583 = vsel %vm286, %v265, 0.0
    %v584 = vadd.f32 %v582, %v583
    %585 = vadd.xlane.f32.xlu0 %v584
    %v586 = vpop.xlane.xlu0 %585
    %v587 = vrot.slane %v586, 4
    %v588 = vadd.f32 %v586, %v587
    %v589 = vrot.slane %v588, 2
    %v590 = vadd.f32 %v588, %v589
    %v591 = vrot.slane %v590, 1
    %v592 = vadd.f32 %v590, %v591
    %s593 = vtos %v592
    %v594 = vrcp.pop 32.0
    %s595 = vtos %v594
    %s596 = smul.f32 %s593, %s595
    %s597 = smul.f32 %s577, 0.5
    %s598 = sadd.f32 %s597, %s437
    %s599 = smul.f32 %s596, 0.01
    %s600 = ssub.f32 %s598, %s599
    %vm601 = vcmp.eq.s32.totalorder %v148, 0
    %vm602 = vcmp.eq.s32.totalorder %v148, 1
    %vm603 = vcmp.eq.s32.totalorder %v148, 2
    %v604 = vstv %s596
    %v605 = vstv %s600
    %v606 = vsel %vm603, %v604, %v605
    %v607 = vstv %s437
    %v608 = vsel %vm602, %v607, %v606
    %v609 = vstv %s577
    %v610 = vsel %vm601, %v609, %v608
    %vm611 = vcmask 24576
    %612 = vst.msk [vmem:[#allocation5] sm:$0x1] %vm611, %v610
    // Predicated region
    $region22: #{tpu_custom_call.1} parent=1 // pred_check
      _
    $region23: #{tpu_custom_call.1} parent=1 // pred_check_branch
      %614 = sbr.rel (0) target = $region25
    $region24: #{tpu_custom_call.1} parent=1 // pred_region
      _
    $region25: #{tpu_custom_call.1} parent=1 // pred_fallthru
      _
    // Predicated region
    $region26: #{tpu_custom_call.1} parent=1 // pred_check
      _
    $region27: #{tpu_custom_call.1} parent=1 // pred_check_branch
      %616 = sbr.rel (0) target = $region29
    $region28: #{tpu_custom_call.1} parent=1 // pred_region
      %s618 = ssub.s32 16, 16
      %619 = vsyncadd [#allocation4], %s618
      %s621 = sshll.u32 [#allocation5], 4
      %s622 = int_to_ptr.vmem [resolvable:$true] %s621
      %624 = dma.vmem_to_hbm [thread:$0]  %s622, 16, %s5, [#allocation4]
    $region29: #{tpu_custom_call.1} parent=1 // pred_fallthru
      _
    // Predicated region
    $region30: #{tpu_custom_call.1} parent=1 // pred_check
      _
    $region31: #{tpu_custom_call.1} parent=1 // pred_check_branch
      %626 = sbr.rel (0) target = $region33
    $region32: #{tpu_custom_call.1} parent=1 // pred_region
      _
    $region33: #{tpu_custom_call.1} parent=1 // pred_fallthru
      _
    // Predicated region
    $region34: #{tpu_custom_call.1} parent=1 // pred_check
      _
    $region35: #{tpu_custom_call.1} parent=1 // pred_check_branch
      %628 = sbr.rel (0) target = $region37
    $region36: #{tpu_custom_call.1} parent=1 // pred_region
      %629 = dma.done [#allocation4], 16
    $region37: #{tpu_custom_call.1} parent=1 // pred_fallthru
      _
    %630 = vsyncpa [#allocation3], 1
    %631 = vsyncpa [#allocation4], 1

</llo_original>
